<compile_context>
chip_gen: v6e
topology: v6e:2x2x1
jax: 0.10.0
libtpu: 0.0.40
codegen_flags: <defaults>
</compile_context>

<pallas_src>
import functools

import jax
import jax.numpy as jnp
from jax.experimental import pallas as pl
from jax.experimental.pallas import tpu as pltpu

_LANE = 128


def _round_up(n, m):
    return ((n + m - 1) // m) * m


def critic_kernel(x_ref, wb_ref, out_ref, *, d):
    """x_ref: (TB, d); wb_ref: (3, d+1, d) packed [W; b] per layer; out_ref: (TB, d)."""
    x = x_ref[...]

    def layer(h, l, relu):
        w = wb_ref[l, :d, :]          # (d, d)   weight, zero padded
        b = wb_ref[l, d:d + 1, :]     # (1, d)   bias,   zero padded
        y = jnp.dot(h, w, preferred_element_type=jnp.float32) + b
        return jnp.maximum(y, 0.0) if relu else y

    h = layer(x, 0, relu=True)        # fc1 + relu
    h = layer(h, 1, relu=True)        # fc2 + relu
    out_ref[...] = layer(h, 2, relu=False).astype(out_ref.dtype)  # fc3


def pack_params(params, compute_dtype=jnp.float32):
    """Zero-pad every layer to a uniform (D, D) weight + (1, D) bias and stack
    them into a single (3, D+1, D) buffer (one DMA instead of six)."""
    w1, b1 = params["w1"], params["b1"]
    w2, b2 = params["w2"], params["b2"]
    w3, b3 = params["w3"], params["b3"]
    in_dim, hid = w1.shape
    out_dim = w3.shape[1]
    D = max(_round_up(in_dim, _LANE), _round_up(hid, _LANE), _LANE)

    def pad_layer(w, b):
        wp = jnp.zeros((D, D), compute_dtype).at[: w.shape[0], : w.shape[1]].set(
            w.astype(compute_dtype))
        bp = jnp.zeros((1, D), compute_dtype).at[:, : b.shape[-1]].set(
            b.reshape(1, -1).astype(compute_dtype))
        return jnp.concatenate([wp, bp], axis=0)  # (D+1, D)

    wb = jnp.stack([pad_layer(w1, b1), pad_layer(w2, b2), pad_layer(w3, b3)])
    return wb, D, in_dim, out_dim


def critic_net_forward(x, params, *, tile_b=512, compute_dtype=jnp.float32):
    """x: (B, input_dim) float32. Returns (B, 1) float32 (CriticNet.forward).

    compute_dtype=jnp.bfloat16 halves x-DMA bytes and doubles MXU throughput on
    v6e/v7x (accumulation stays f32); default f32 for exact parity on v5e.
    """
    wb, D, in_dim, out_dim = pack_params(params, compute_dtype)

    B = x.shape[0]
    TB = min(tile_b, _round_up(B, 8))          # batch tile, multiple of 8
    Bp = _round_up(B, TB)                      # padded batch

    # Pad batch rows and feature lanes with zeros (row-independent => exact).
    xp = jnp.zeros((Bp, D), compute_dtype).at[:B, :in_dim].set(
        x.astype(compute_dtype))

    grid = (pl.cdiv(Bp, TB),)
    out_padded = pl.pallas_call(
        functools.partial(critic_kernel, d=D),
        out_shape=jax.ShapeDtypeStruct((Bp, D), jnp.float32),
        grid=grid,
        in_specs=[
            # x: pipelined batch tiles.
            pl.BlockSpec((TB, D), lambda i: (i, 0)),
            # packed weights+biases: constant index -> fetched once, VMEM-resident.
            pl.BlockSpec((3, D + 1, D), lambda i: (0, 0, 0)),
        ],
        # Lane-dense output tile (col 0 holds the real value); sliced below.
        out_specs=pl.BlockSpec((TB, D), lambda i: (i, 0)),
        compiler_params=pltpu.CompilerParams(
            dimension_semantics=("parallel",),   # megacore shard on v7x
        ),
    )(xp, wb)

    return out_padded[:B, :out_dim]


def init_params(key, input_dim, hidden_dim=64):
    """Deterministic synthetic init (shapes mirror the nn.Linear layers,
    weights stored (in, out))."""
    k1, k2, k3, k4, k5, k6 = jax.random.split(key, 6)
    w1 = jax.random.normal(k1, (input_dim, hidden_dim), jnp.float32) * 0.1
    b1 = jax.random.normal(k2, (hidden_dim,), jnp.float32) * 0.1
    w2 = jax.random.normal(k3, (hidden_dim, hidden_dim), jnp.float32) * 0.1
    b2 = jax.random.normal(k4, (hidden_dim,), jnp.float32) * 0.1
    w3 = jax.random.normal(k5, (hidden_dim, 1), jnp.float32) * 0.1
    b3 = jax.random.normal(k6, (1,), jnp.float32) * 0.1
    return {"w1": w1, "b1": b1, "w2": w2, "b2": b2, "w3": w3, "b3": b3}


def reference_forward(x, params):
    h1 = jnp.maximum(x @ params["w1"] + params["b1"], 0.0)
    h2 = jnp.maximum(h1 @ params["w2"] + params["b2"], 0.0)
    return h2 @ params["w3"] + params["b3"]


if __name__ == "__main__":
    key = jax.random.PRNGKey(0)
    kx, kp = jax.random.split(key)

    batch = 8
    input_dim = 32
    hidden_dim = 64

    x = jax.random.normal(kx, (batch, input_dim), jnp.float32)
    params = init_params(kp, input_dim, hidden_dim)

    # TODO(synk): PyTorch module's logging / try-except zero-fallback is host
    # control flow and is intentionally not replicated in the kernel.
    out = critic_net_forward(x, params)
    out = jax.block_until_ready(out)

    ref = reference_forward(x, params)
    assert out.shape == (batch, 1), out.shape
    assert jnp.allclose(out, ref, atol=1e-4, rtol=1e-4), "mismatch vs reference"

    print("KERNEL_OK")
</pallas_src>

<mosaic_0001>
module attributes {stable_mosaic.version = 11 : i64} {
  func.func @critic_kernel(%arg0: i32, %arg1: memref<8x128xf32, #tpu.memory_space<vmem>>, %arg2: memref<3x129x128xf32, #tpu.memory_space<vmem>>, %arg3: memref<8x128xf32, #tpu.memory_space<vmem>>) attributes {dimension_semantics = [#tpu.dimension_semantics<parallel>], iteration_bounds = array<i64: 1>, scalar_prefetch = 0 : i64, scratch_operands = 0 : i64, tpu.core_type = #tpu.core_type<tc>, window_params = [{transform_indices = @transform_0, window_bounds = array<i64: 8, 128>}, {pipeline_mode = #tpu.pipeline_mode<synchronous>, transform_indices = @transform_1, window_bounds = array<i64: 3, 129, 128>}, {transform_indices = @transform_2, window_bounds = array<i64: 8, 128>}]} {
    %c0 = arith.constant 0 : index
    %c0_0 = arith.constant 0 : index
    %0 = vector.load %arg1[%c0, %c0_0] : memref<8x128xf32, #tpu.memory_space<vmem>>, vector<8x128xf32>
    %c0_1 = arith.constant 0 : index
    %c0_2 = arith.constant 0 : index
    %c0_3 = arith.constant 0 : index
    %1 = vector.load %arg2[%c0_1, %c0_2, %c0_3] : memref<3x129x128xf32, #tpu.memory_space<vmem>>, vector<1x128x128xf32>
    %2 = vector.shape_cast %1 : vector<1x128x128xf32> to vector<128x128xf32>
    %c0_4 = arith.constant 0 : index
    %c128 = arith.constant 128 : index
    %c0_5 = arith.constant 0 : index
    %3 = vector.load %arg2[%c0_4, %c128, %c0_5] : memref<3x129x128xf32, #tpu.memory_space<vmem>>, vector<1x1x128xf32>
    %4 = vector.shape_cast %3 : vector<1x1x128xf32> to vector<1x128xf32>
    %cst = arith.constant dense<0.000000e+00> : vector<8x128xf32>
    %5 = tpu.matmul %0, %2, %cst {dimension_numbers = #tpu.dot_dimension_numbers<[1], [0], [0], [1], [0, 0, 1, 1], [], []>} : vector<8x128xf32>, vector<128x128xf32>, vector<8x128xf32> -> vector<8x128xf32>
    %6 = vector.broadcast %4 : vector<1x128xf32> to vector<8x128xf32>
    %7 = arith.addf %5, %6 : vector<8x128xf32>
    %cst_6 = arith.constant 0.000000e+00 : f32
    %8 = vector.broadcast %cst_6 : f32 to vector<8x128xf32>
    %9 = arith.maximumf %7, %8 : vector<8x128xf32>
    %c1 = arith.constant 1 : index
    %c0_7 = arith.constant 0 : index
    %c0_8 = arith.constant 0 : index
    %10 = vector.load %arg2[%c1, %c0_7, %c0_8] : memref<3x129x128xf32, #tpu.memory_space<vmem>>, vector<1x128x128xf32>
    %11 = vector.shape_cast %10 : vector<1x128x128xf32> to vector<128x128xf32>
    %c1_9 = arith.constant 1 : index
    %c128_10 = arith.constant 128 : index
    %c0_11 = arith.constant 0 : index
    %12 = vector.load %arg2[%c1_9, %c128_10, %c0_11] : memref<3x129x128xf32, #tpu.memory_space<vmem>>, vector<1x1x128xf32>
    %13 = vector.shape_cast %12 : vector<1x1x128xf32> to vector<1x128xf32>
    %cst_12 = arith.constant dense<0.000000e+00> : vector<8x128xf32>
    %14 = tpu.matmul %9, %11, %cst_12 {dimension_numbers = #tpu.dot_dimension_numbers<[1], [0], [0], [1], [0, 0, 1, 1], [], []>} : vector<8x128xf32>, vector<128x128xf32>, vector<8x128xf32> -> vector<8x128xf32>
    %15 = vector.broadcast %13 : vector<1x128xf32> to vector<8x128xf32>
    %16 = arith.addf %14, %15 : vector<8x128xf32>
    %cst_13 = arith.constant 0.000000e+00 : f32
    %17 = vector.broadcast %cst_13 : f32 to vector<8x128xf32>
    %18 = arith.maximumf %16, %17 : vector<8x128xf32>
    %c2 = arith.constant 2 : index
    %c0_14 = arith.constant 0 : index
    %c0_15 = arith.constant 0 : index
    %19 = vector.load %arg2[%c2, %c0_14, %c0_15] : memref<3x129x128xf32, #tpu.memory_space<vmem>>, vector<1x128x128xf32>
    %20 = vector.shape_cast %19 : vector<1x128x128xf32> to vector<128x128xf32>
    %c2_16 = arith.constant 2 : index
    %c128_17 = arith.constant 128 : index
    %c0_18 = arith.constant 0 : index
    %21 = vector.load %arg2[%c2_16, %c128_17, %c0_18] : memref<3x129x128xf32, #tpu.memory_space<vmem>>, vector<1x1x128xf32>
    %22 = vector.shape_cast %21 : vector<1x1x128xf32> to vector<1x128xf32>
    %cst_19 = arith.constant dense<0.000000e+00> : vector<8x128xf32>
    %23 = tpu.matmul %18, %20, %cst_19 {dimension_numbers = #tpu.dot_dimension_numbers<[1], [0], [0], [1], [0, 0, 1, 1], [], []>} : vector<8x128xf32>, vector<128x128xf32>, vector<8x128xf32> -> vector<8x128xf32>
    %24 = vector.broadcast %22 : vector<1x128xf32> to vector<8x128xf32>
    %25 = arith.addf %23, %24 : vector<8x128xf32>
    %c0_20 = arith.constant 0 : index
    %c0_21 = arith.constant 0 : index
    %26 = vector.load %arg3[%c0_20, %c0_21] : memref<8x128xf32, #tpu.memory_space<vmem>>, vector<8x128xf32>
    tpu.vector_store %arg3[%c0_20, %c0_21], %25 {strides = array<i32>} : memref<8x128xf32, #tpu.memory_space<vmem>>, vector<8x128xf32>,
    return
  }
  func.func @transform_0(%arg0: i32) -> (i32, i32) {
    %c0_i32 = arith.constant 0 : i32
    %c0_i32_0 = arith.constant 0 : i32
    return %arg0, %c0_i32 : i32, i32
  }
  func.func @transform_1(%arg0: i32) -> (i32, i32, i32) {
    %c0_i32 = arith.constant 0 : i32
    %c0_i32_0 = arith.constant 0 : i32
    %c0_i32_1 = arith.constant 0 : i32
    %c0_i32_2 = arith.constant 0 : i32
    return %c0_i32, %c0_i32_0, %c0_i32_1 : i32, i32, i32
  }
  func.func @transform_2(%arg0: i32) -> (i32, i32) {
    %c0_i32 = arith.constant 0 : i32
    %c0_i32_0 = arith.constant 0 : i32
    return %arg0, %c0_i32 : i32, i32
  }
}

</mosaic_0001>

<llo_original>
// kernel: tpu_custom_call.1
$region0: #{tpu_custom_call.1}
  #allocation0 [shape = 'u32[]', space=smem, size = 0x4, offset = 0x4, fixed_abs, tag = 'smem constant byte address 0x4 - core index']
  #allocation1 [shape = 'u32[144,128]{1,0:T(1,128)}', space=vmem, size = 0x12000, scoped, tag = 'internal scratch']
  %s0 = inlined_call_operand.hbm [shape: f32[8,128], index: 0, kind: input, shape index: {}]
  %s1 = inlined_call_operand.hbm [shape: f32[3,129,128], index: 1, kind: input, shape index: {}]
  %s2 = inlined_call_operand.hbm [shape: f32[8,128], index: 2, kind: output, shape index: {}]
  %s3 = sld [smem:[#allocation0]]
  $region26: #{tpu_custom_call.1} parent=0
    _
  %s5 = ssub.s32 1, %s3
  %s6 = scalar_select 0, %s5, %s3
  $region1: #{tpu_custom_call.1} parent=0
    #allocation2 [shape = 'u8[4096]{0}', space=vmem, size = 0x1000, scoped, tag = 'input window, operand 0, single buffered']
    #allocation3 [shape = 's32[1]{0}', space=sflag, size = 0x4, scoped, tag = 'scoped memory for tpu_custom_call.1']
    #allocation4 [shape = 's32[1]{0}', space=sflag, size = 0x4, scoped, tag = 'scoped memory for tpu_custom_call.1']
    #allocation5 [shape = 'u8[208896]{0}', space=vmem, size = 0x33000, scoped, tag = 'input window, operand 1, single buffered']
    #allocation6 [shape = 's32[1]{0}', space=sflag, size = 0x4, scoped, tag = 'scoped memory for tpu_custom_call.1']
    #allocation7 [shape = 'u8[4096]{0}', space=vmem, size = 0x1000, scoped, tag = 'output window, operand 0, single buffered']
    %7 = vsyncpa [#allocation3], 0
    %8 = vsyncpa [#allocation6], 0
    %9 = vsyncpa [#allocation4], 0
    // Predicated region
    $region2: #{tpu_custom_call.1} parent=1 // pred_check
      _
    $region3: #{tpu_custom_call.1} parent=1 // pred_check_branch
      %11 = sbr.rel (0) target = $region5
    $region4: #{tpu_custom_call.1} parent=1 // pred_region
      %s13 = ssub.s32 128, 128
      %14 = vsyncadd [#allocation3], %s13
      %s16 = sshll.u32 [#allocation2], 4
      %s17 = int_to_ptr.vmem [resolvable:$true] %s16
      %19 = dma.hbm_to_vmem [thread:$0]  %s0, 128, %s17, [#allocation3]
    $region5: #{tpu_custom_call.1} parent=1 // pred_fallthru
      _
    // Predicated region
    $region6: #{tpu_custom_call.1} parent=1 // pred_check
      _
    $region7: #{tpu_custom_call.1} parent=1 // pred_check_branch
      %21 = sbr.rel (0) target = $region9
    $region8: #{tpu_custom_call.1} parent=1 // pred_region
      %s23 = ssub.s32 6528, 6528
      %24 = vsyncadd [#allocation6], %s23
      %s25 = sshll.u32 [#allocation5], 4
      %s26 = int_to_ptr.vmem [resolvable:$true] %s25
      %31 = dma.hbm_to_vmem [thread:$0]  %s1, 6528, %s26, [#allocation6], 128, 128, 8
    $region9: #{tpu_custom_call.1} parent=1 // pred_fallthru
      _
    // Predicated region
    $region10: #{tpu_custom_call.1} parent=1 // pred_check
      _
    $region11: #{tpu_custom_call.1} parent=1 // pred_check_branch
      %33 = sbr.rel (0) target = $region13
    $region12: #{tpu_custom_call.1} parent=1 // pred_region
      %34 = dma.done [#allocation3], 128
    $region13: #{tpu_custom_call.1} parent=1 // pred_fallthru
      _
    // Predicated region
    $region14: #{tpu_custom_call.1} parent=1 // pred_check
      _
    $region15: #{tpu_custom_call.1} parent=1 // pred_check_branch
      %36 = sbr.rel (0) target = $region17
    $region16: #{tpu_custom_call.1} parent=1 // pred_region
      %37 = dma.done [#allocation6], 6528
    $region17: #{tpu_custom_call.1} parent=1 // pred_fallthru
      _
    %v38 = vld [vmem:[#allocation2] sm:$0xff]
    %v39 = vld [vmem:[#allocation5] sm:$0xff]
    %v40 = vld [vmem:[#allocation5 + $0x8] sm:$0xff]
    %v41 = vld [vmem:[#allocation5 + $0x10] sm:$0xff]
    %v42 = vld [vmem:[#allocation5 + $0x18] sm:$0xff]
    %v43 = vld [vmem:[#allocation5 + $0x20] sm:$0xff]
    %v44 = vld [vmem:[#allocation5 + $0x28] sm:$0xff]
    %v45 = vld [vmem:[#allocation5 + $0x30] sm:$0xff]
    %v46 = vld [vmem:[#allocation5 + $0x38] sm:$0xff]
    %v47 = vld [vmem:[#allocation5 + $0x40] sm:$0xff]
    %v48 = vld [vmem:[#allocation5 + $0x48] sm:$0xff]
    %v49 = vld [vmem:[#allocation5 + $0x50] sm:$0xff]
    %v50 = vld [vmem:[#allocation5 + $0x58] sm:$0xff]
    %v51 = vld [vmem:[#allocation5 + $0x60] sm:$0xff]
    %v52 = vld [vmem:[#allocation5 + $0x68] sm:$0xff]
    %v53 = vld [vmem:[#allocation5 + $0x70] sm:$0xff]
    %v54 = vld [vmem:[#allocation5 + $0x78] sm:$0xff]
    %v55 = vld [vmem:[#allocation5 + $0x80] sm:$0x1]
    %v56 = vlaneseq
    %v57 = vshrl.u32 %v56, 7
    %v58 = vsub.s32 0, %v57
    %v59 = vrot.slane %v55, %v58
    %60 = vmatprep.subr.mxu0 0.0
    %61 = vmatpush1.msra.mxu0 %v54
    %62 = vmatprep.subr.mxu0 0.0
    %63 = vmatpush1.msra.mxu0 %v53
    %64 = vmatprep.subr.mxu0 0.0
    %65 = vmatpush1.msra.mxu0 %v52
    %66 = vmatprep.subr.mxu0 0.0
    %67 = vmatpush1.msra.mxu0 %v51
    %68 = vmatprep.subr.mxu0 0.0
    %69 = vmatpush1.msra.mxu0 %v50
    %70 = vmatprep.subr.mxu0 0.0
    %71 = vmatpush1.msra.mxu0 %v49
    %72 = vmatprep.subr.mxu0 0.0
    %73 = vmatpush1.msra.mxu0 %v48
    %74 = vmatprep.subr.mxu0 0.0
    %75 = vmatpush1.msra.mxu0 %v47
    %76 = vmatprep.subr.mxu0 0.0
    %77 = vmatpush1.msra.mxu0 %v46
    %78 = vmatprep.subr.mxu0 0.0
    %79 = vmatpush1.msra.mxu0 %v45
    %80 = vmatprep.subr.mxu0 0.0
    %81 = vmatpush1.msra.mxu0 %v44
    %82 = vmatprep.subr.mxu0 0.0
    %83 = vmatpush1.msra.mxu0 %v43
    %84 = vmatprep.subr.mxu0 0.0
    %85 = vmatpush1.msra.mxu0 %v42
    %86 = vmatprep.subr.mxu0 0.0
    %87 = vmatpush1.msra.mxu0 %v41
    %88 = vmatprep.subr.mxu0 0.0
    %89 = vmatpush1.msra.mxu0 %v40
    %90 = vmatprep.subr.mxu0 0.0
    %91 = vmatpush1.msra.mxu0 %v39
    %92 = vmatprep.subr.mxu0 0.0
    %93 = vmatpush2.msra.mxu0 0.0
    %94 = vmatprep.subr.mxu0 0.0
    %95 = vmatpush2.msra.mxu0 0.0
    %96 = vmatprep.subr.mxu0 0.0
    %97 = vmatpush2.msra.mxu0 0.0
    %98 = vmatprep.subr.mxu0 0.0
    %99 = vmatpush2.msra.mxu0 0.0
    %100 = vmatprep.subr.mxu0 0.0
    %101 = vmatpush2.msra.mxu0 0.0
    %102 = vmatprep.subr.mxu0 0.0
    %103 = vmatpush2.msra.mxu0 0.0
    %104 = vmatprep.subr.mxu0 0.0
    %105 = vmatpush2.msra.mxu0 0.0
    %106 = vmatprep.subr.mxu0 0.0
    %107 = vmatpush2.msra.mxu0 0.0
    %108 = vmatprep.subr.mxu0 0.0
    %109 = vmatpush2.msra.mxu0 0.0
    %110 = vmatprep.subr.mxu0 0.0
    %111 = vmatpush2.msra.mxu0 0.0
    %112 = vmatprep.subr.mxu0 0.0
    %113 = vmatpush2.msra.mxu0 0.0
    %114 = vmatprep.subr.mxu0 0.0
    %115 = vmatpush2.msra.mxu0 0.0
    %116 = vmatprep.subr.mxu0 0.0
    %117 = vmatpush2.msra.mxu0 0.0
    %118 = vmatprep.subr.mxu0 0.0
    %119 = vmatpush2.msra.mxu0 0.0
    %120 = vmatprep.subr.mxu0 0.0
    %121 = vmatpush2.msra.mxu0 0.0
    %122 = vmatprep.subr.mxu0 0.0
    %123 = vmatpush2.msra.mxu0 0.0
    %124 = vmatprep.mubr.f32.mxu0 0.0
    %125 = vmatmul.mubr.f32.gmra.mxu0 %v38
    %v126 = vpop.f32.mrf.mxu0
    %v127 = vadd.f32 %v59, %v126
    %v128 = vpop.f32.mrf.mxu0
    %129 = vdwg.mxu0
    %v130 = vmax.f32 %v127, 0.0
    %s131 = scalar_lea.vmem [#allocation5], 136
    %v132 = vld [vmem:[%s131] sm:$0xff]
    %v133 = vld [vmem:[%s131 + $0x8] sm:$0xff]
    %v134 = vld [vmem:[%s131 + $0x10] sm:$0xff]
    %v135 = vld [vmem:[%s131 + $0x18] sm:$0xff]
    %v136 = vld [vmem:[%s131 + $0x20] sm:$0xff]
    %v137 = vld [vmem:[%s131 + $0x28] sm:$0xff]
    %v138 = vld [vmem:[%s131 + $0x30] sm:$0xff]
    %v139 = vld [vmem:[%s131 + $0x38] sm:$0xff]
    %v140 = vld [vmem:[%s131 + $0x40] sm:$0xff]
    %v141 = vld [vmem:[%s131 + $0x48] sm:$0xff]
    %v142 = vld [vmem:[%s131 + $0x50] sm:$0xff]
    %v143 = vld [vmem:[%s131 + $0x58] sm:$0xff]
    %v144 = vld [vmem:[%s131 + $0x60] sm:$0xff]
    %v145 = vld [vmem:[%s131 + $0x68] sm:$0xff]
    %v146 = vld [vmem:[%s131 + $0x70] sm:$0xff]
    %v147 = vld [vmem:[%s131 + $0x78] sm:$0xff]
    %v148 = vld [vmem:[%s131 + $0x80] sm:$0x1]
    %v149 = vlaneseq
    %v150 = vshrl.u32 %v149, 7
    %v151 = vsub.s32 0, %v150
    %v152 = vrot.slane %v148, %v151
    %153 = vmatprep.subr.mxu0 0.0
    %154 = vmatpush1.msra.mxu0 %v147
    %155 = vmatprep.subr.mxu0 0.0
    %156 = vmatpush1.msra.mxu0 %v146
    %157 = vmatprep.subr.mxu0 0.0
    %158 = vmatpush1.msra.mxu0 %v145
    %159 = vmatprep.subr.mxu0 0.0
    %160 = vmatpush1.msra.mxu0 %v144
    %161 = vmatprep.subr.mxu0 0.0
    %162 = vmatpush1.msra.mxu0 %v143
    %163 = vmatprep.subr.mxu0 0.0
    %164 = vmatpush1.msra.mxu0 %v142
    %165 = vmatprep.subr.mxu0 0.0
    %166 = vmatpush1.msra.mxu0 %v141
    %167 = vmatprep.subr.mxu0 0.0
    %168 = vmatpush1.msra.mxu0 %v140
    %169 = vmatprep.subr.mxu0 0.0
    %170 = vmatpush1.msra.mxu0 %v139
    %171 = vmatprep.subr.mxu0 0.0
    %172 = vmatpush1.msra.mxu0 %v138
    %173 = vmatprep.subr.mxu0 0.0
    %174 = vmatpush1.msra.mxu0 %v137
    %175 = vmatprep.subr.mxu0 0.0
    %176 = vmatpush1.msra.mxu0 %v136
    %177 = vmatprep.subr.mxu0 0.0
    %178 = vmatpush1.msra.mxu0 %v135
    %179 = vmatprep.subr.mxu0 0.0
    %180 = vmatpush1.msra.mxu0 %v134
    %181 = vmatprep.subr.mxu0 0.0
    %182 = vmatpush1.msra.mxu0 %v133
    %183 = vmatprep.subr.mxu0 0.0
    %184 = vmatpush1.msra.mxu0 %v132
    %185 = vmatprep.subr.mxu0 0.0
    %186 = vmatpush2.msra.mxu0 0.0
    %187 = vmatprep.subr.mxu0 0.0
    %188 = vmatpush2.msra.mxu0 0.0
    %189 = vmatprep.subr.mxu0 0.0
    %190 = vmatpush2.msra.mxu0 0.0
    %191 = vmatprep.subr.mxu0 0.0
    %192 = vmatpush2.msra.mxu0 0.0
    %193 = vmatprep.subr.mxu0 0.0
    %194 = vmatpush2.msra.mxu0 0.0
    %195 = vmatprep.subr.mxu0 0.0
    %196 = vmatpush2.msra.mxu0 0.0
    %197 = vmatprep.subr.mxu0 0.0
    %198 = vmatpush2.msra.mxu0 0.0
    %199 = vmatprep.subr.mxu0 0.0
    %200 = vmatpush2.msra.mxu0 0.0
    %201 = vmatprep.subr.mxu0 0.0
    %202 = vmatpush2.msra.mxu0 0.0
    %203 = vmatprep.subr.mxu0 0.0
    %204 = vmatpush2.msra.mxu0 0.0
    %205 = vmatprep.subr.mxu0 0.0
    %206 = vmatpush2.msra.mxu0 0.0
    %207 = vmatprep.subr.mxu0 0.0
    %208 = vmatpush2.msra.mxu0 0.0
    %209 = vmatprep.subr.mxu0 0.0
    %210 = vmatpush2.msra.mxu0 0.0
    %211 = vmatprep.subr.mxu0 0.0
    %212 = vmatpush2.msra.mxu0 0.0
    %213 = vmatprep.subr.mxu0 0.0
    %214 = vmatpush2.msra.mxu0 0.0
    %215 = vmatprep.subr.mxu0 0.0
    %216 = vmatpush2.msra.mxu0 0.0
    %217 = vmatprep.mubr.f32.mxu0 0.0
    %218 = vmatmul.mubr.f32.gmra.mxu0 %v130
    %v219 = vpop.f32.mrf.mxu0
    %v220 = vadd.f32 %v152, %v219
    %v221 = vpop.f32.mrf.mxu0
    %222 = vdwg.mxu0
    %v223 = vmax.f32 %v220, 0.0
    %s224 = scalar_lea.vmem [#allocation5], 272
    %v225 = vld [vmem:[%s224] sm:$0xff]
    %v226 = vld [vmem:[%s224 + $0x8] sm:$0xff]
    %v227 = vld [vmem:[%s224 + $0x10] sm:$0xff]
    %v228 = vld [vmem:[%s224 + $0x18] sm:$0xff]
    %v229 = vld [vmem:[%s224 + $0x20] sm:$0xff]
    %v230 = vld [vmem:[%s224 + $0x28] sm:$0xff]
    %v231 = vld [vmem:[%s224 + $0x30] sm:$0xff]
    %v232 = vld [vmem:[%s224 + $0x38] sm:$0xff]
    %v233 = vld [vmem:[%s224 + $0x40] sm:$0xff]
    %v234 = vld [vmem:[%s224 + $0x48] sm:$0xff]
    %v235 = vld [vmem:[%s224 + $0x50] sm:$0xff]
    %v236 = vld [vmem:[%s224 + $0x58] sm:$0xff]
    %v237 = vld [vmem:[%s224 + $0x60] sm:$0xff]
    %v238 = vld [vmem:[%s224 + $0x68] sm:$0xff]
    %v239 = vld [vmem:[%s224 + $0x70] sm:$0xff]
    %v240 = vld [vmem:[%s224 + $0x78] sm:$0xff]
    %v241 = vld [vmem:[%s224 + $0x80] sm:$0x1]
    %v242 = vlaneseq
    %v243 = vshrl.u32 %v242, 7
    %v244 = vsub.s32 0, %v243
    %v245 = vrot.slane %v241, %v244
    %246 = vmatprep.subr.mxu0 0.0
    %247 = vmatpush1.msra.mxu0 %v240
    %248 = vmatprep.subr.mxu0 0.0
    %249 = vmatpush1.msra.mxu0 %v239
    %250 = vmatprep.subr.mxu0 0.0
    %251 = vmatpush1.msra.mxu0 %v238
    %252 = vmatprep.subr.mxu0 0.0
    %253 = vmatpush1.msra.mxu0 %v237
    %254 = vmatprep.subr.mxu0 0.0
    %255 = vmatpush1.msra.mxu0 %v236
    %256 = vmatprep.subr.mxu0 0.0
    %257 = vmatpush1.msra.mxu0 %v235
    %258 = vmatprep.subr.mxu0 0.0
    %259 = vmatpush1.msra.mxu0 %v234
    %260 = vmatprep.subr.mxu0 0.0
    %261 = vmatpush1.msra.mxu0 %v233
    %262 = vmatprep.subr.mxu0 0.0
    %263 = vmatpush1.msra.mxu0 %v232
    %264 = vmatprep.subr.mxu0 0.0
    %265 = vmatpush1.msra.mxu0 %v231
    %266 = vmatprep.subr.mxu0 0.0
    %267 = vmatpush1.msra.mxu0 %v230
    %268 = vmatprep.subr.mxu0 0.0
    %269 = vmatpush1.msra.mxu0 %v229
    %270 = vmatprep.subr.mxu0 0.0
    %271 = vmatpush1.msra.mxu0 %v228
    %272 = vmatprep.subr.mxu0 0.0
    %273 = vmatpush1.msra.mxu0 %v227
    %274 = vmatprep.subr.mxu0 0.0
    %275 = vmatpush1.msra.mxu0 %v226
    %276 = vmatprep.subr.mxu0 0.0
    %277 = vmatpush1.msra.mxu0 %v225
    %278 = vmatprep.subr.mxu0 0.0
    %279 = vmatpush2.msra.mxu0 0.0
    %280 = vmatprep.subr.mxu0 0.0
    %281 = vmatpush2.msra.mxu0 0.0
    %282 = vmatprep.subr.mxu0 0.0
    %283 = vmatpush2.msra.mxu0 0.0
    %284 = vmatprep.subr.mxu0 0.0
    %285 = vmatpush2.msra.mxu0 0.0
    %286 = vmatprep.subr.mxu0 0.0
    %287 = vmatpush2.msra.mxu0 0.0
    %288 = vmatprep.subr.mxu0 0.0
    %289 = vmatpush2.msra.mxu0 0.0
    %290 = vmatprep.subr.mxu0 0.0
    %291 = vmatpush2.msra.mxu0 0.0
    %292 = vmatprep.subr.mxu0 0.0
    %293 = vmatpush2.msra.mxu0 0.0
    %294 = vmatprep.subr.mxu0 0.0
    %295 = vmatpush2.msra.mxu0 0.0
    %296 = vmatprep.subr.mxu0 0.0
    %297 = vmatpush2.msra.mxu0 0.0
    %298 = vmatprep.subr.mxu0 0.0
    %299 = vmatpush2.msra.mxu0 0.0
    %300 = vmatprep.subr.mxu0 0.0
    %301 = vmatpush2.msra.mxu0 0.0
    %302 = vmatprep.subr.mxu0 0.0
    %303 = vmatpush2.msra.mxu0 0.0
    %304 = vmatprep.subr.mxu0 0.0
    %305 = vmatpush2.msra.mxu0 0.0
    %306 = vmatprep.subr.mxu0 0.0
    %307 = vmatpush2.msra.mxu0 0.0
    %308 = vmatprep.subr.mxu0 0.0
    %309 = vmatpush2.msra.mxu0 0.0
    %310 = vmatprep.mubr.f32.mxu0 0.0
    %311 = vmatmul.mubr.f32.gmra.mxu0 %v223
    %v312 = vpop.f32.mrf.mxu0
    %v313 = vadd.f32 %v245, %v312
    %v314 = vpop.f32.mrf.mxu0
    %315 = vdwg.mxu0
    %316 = vst [vmem:[#allocation7] sm:$0xff] %v313
    // Predicated region
    $region18: #{tpu_custom_call.1} parent=1 // pred_check
      _
    $region19: #{tpu_custom_call.1} parent=1 // pred_check_branch
      %318 = sbr.rel (0) target = $region21
    $region20: #{tpu_custom_call.1} parent=1 // pred_region
      %s320 = ssub.s32 128, 128
      %321 = vsyncadd [#allocation4], %s320
      %s323 = sshll.u32 [#allocation7], 4
      %s324 = int_to_ptr.vmem [resolvable:$true] %s323
      %326 = dma.vmem_to_hbm [thread:$0]  %s324, 128, %s2, [#allocation4]
    $region21: #{tpu_custom_call.1} parent=1 // pred_fallthru
      _
    // Predicated region
    $region22: #{tpu_custom_call.1} parent=1 // pred_check
      _
    $region23: #{tpu_custom_call.1} parent=1 // pred_check_branch
      %328 = sbr.rel (0) target = $region25
    $region24: #{tpu_custom_call.1} parent=1 // pred_region
      %329 = dma.done [#allocation4], 128
    $region25: #{tpu_custom_call.1} parent=1 // pred_fallthru
      _
    %330 = vsyncpa [#allocation3], 1
    %331 = vsyncpa [#allocation6], 1
    %332 = vsyncpa [#allocation4], 1

</llo_original>
